<compile_context>
chip_gen: v7x
topology: tpu7x:2x2x1
jax: 0.10.0
libtpu: 0.0.40
codegen_flags: <defaults>
</compile_context>

<pallas_src>
from functools import partial
from typing import NamedTuple

import jax
import jax.numpy as jnp
from jax.experimental import pallas as pl
from jax.experimental.pallas import tpu as pltpu


def _round_up(x, m):
    return ((x + m - 1) // m) * m


def _cdiv(a, b):
    return (a + b - 1) // b


def _gelu_f32(g, approximate):
    if approximate:
        # tanh approximation lowers to the EUP (its own VLIW slot) instead of
        # a long erf polynomial on the VALU.
        c = jnp.float32(0.7978845608028654)  # sqrt(2/pi)
        return 0.5 * g * (1.0 + jnp.tanh(c * (g + 0.044715 * (g * g * g))))
    # exact (erf) GELU -- matches torch.nn.functional.gelu default
    inv_sqrt2 = jnp.float32(0.7071067811865476)
    return 0.5 * g * (1.0 + jax.lax.erf(g * inv_sqrt2))


# ----------------------------- kernels ------------------------------------


def _geglu_kernel_single_k(x_ref, w_ref, b_ref, o_ref, *, tn, approximate):
    # grid = (n, m): the whole K reduction is one wide MXU dot, so there is no
    # accumulator scratch, no zero-fill and no read-modify-write traffic.
    y = jnp.dot(x_ref[...], w_ref[...], preferred_element_type=jnp.float32)
    y = y + b_ref[...]
    h = y[:, :tn]                      # value half (128-lane-aligned split)
    g = y[:, tn:]                      # gate half
    o_ref[...] = (h * _gelu_f32(g, approximate)).astype(o_ref.dtype)


def _geglu_kernel_k_tiled(x_ref, w_ref, b_ref, o_ref, acc_ref, *, tn,
                          approximate):
    # grid = (n, m, k); k is the reduction axis (innermost, "arbitrary").
    k = pl.program_id(2)
    part = jnp.dot(x_ref[...], w_ref[...], preferred_element_type=jnp.float32)

    @pl.when(k == 0)
    def _():
        # fold the bias into the first partial product: no zero-fill pass and
        # no separate bias add in the epilogue.
        acc_ref[...] = part + b_ref[...]

    @pl.when(k > 0)
    def _():
        acc_ref[...] += part

    @pl.when(k == pl.num_programs(2) - 1)
    def _():
        y = acc_ref[...]
        h = y[:, :tn]
        g = y[:, tn:]
        o_ref[...] = (h * _gelu_f32(g, approximate)).astype(o_ref.dtype)


# ------------------------- tile selection / params -------------------------


def _vmem_capacity_bytes():
    try:
        return int(pltpu.get_tpu_info().vmem_capacity_bytes)
    except Exception:
        return 64 * 1024 * 1024  # conservative default (v7x has the smallest)


def _vmem_estimate(tm, tn, tk, num_k, in_bytes, out_bytes, weight_buffers):
    x_b = 2 * tm * tk * in_bytes                     # double-buffered x tile
    w_b = weight_buffers * tk * 2 * tn * in_bytes    # weight tile buffers
    o_b = 2 * tm * tn * out_bytes                    # output tile buffers
    b_b = 2 * 2 * tn * 4                             # bias tile buffers
    acc = tm * 2 * tn * 4 if num_k > 1 else 0        # f32 accumulator scratch
    return x_b + w_b + o_b + b_b + acc


class GegluParams(NamedTuple):
    w_r: jax.Array          # (dim_in_p, 2*dim_out_p)  [Wx_tile | Wg_tile] / N tile
    b_r: jax.Array          # (1, 2*dim_out_p), float32
    dim_in: int
    dim_out: int
    dim_in_p: int
    dim_out_p: int
    tn: int
    tk: int
    tm_hint: int
    num_k: int
    weight_buffers: int
    vmem_limit_bytes: int
    approximate: bool


def prepare_geglu_params(w, b, *, compute_dtype=None, tm=None, tn=None,
                         tk_max=None, weight_buffers=2, approximate=False):
    """Repack + pad the Linear(dim_in, 2*dim_out) weight ONCE (call this at
    parameter-load time, not per forward call).

    w: [dim_in, 2*dim_out]  (= PyTorch proj.weight.T; value half then gate half)
    b: [2*dim_out]
    compute_dtype: dtype fed to the MXU (e.g. jnp.bfloat16) -- accumulation is
      always f32.  None keeps the given dtype (exact f32 parity).
    """
    dim_in, two_dim_out = w.shape
    dim_out = two_dim_out // 2
    if compute_dtype is not None:
        w = w.astype(compute_dtype)
    in_bytes = jnp.dtype(w.dtype).itemsize

    vmem_cap = _vmem_capacity_bytes()
    vmem_limit = vmem_cap - max(8 * 1024 * 1024, vmem_cap // 8)
    budget = int(vmem_limit * 0.75)   # headroom for compiler scratch

    # desired tiles (generation-aware through the VMEM budget)
    tm_d = tm if tm is not None else (512 if budget >= 64 * 1024 * 1024 else 256)
    tm_d = max(32, _round_up(tm_d, 32))
    tn_d = tn if tn is not None else 1024
    tn_eff = min(_round_up(dim_out, 128), _round_up(tn_d, 128))
    if tk_max is None:
        tk_max = 8192 if in_bytes <= 2 else 4096
    tk_eff = dim_in if dim_in <= tk_max else max(128, (tk_max // 128) * 128)

    def _num_k(tk):
        return 1 if tk >= dim_in else _cdiv(dim_in, tk)

    # shrink until the working set fits the per-chip VMEM budget; prefer
    # shrinking tn, then splitting K, then shrinking tm.
    while _vmem_estimate(tm_d, tn_eff, tk_eff, _num_k(tk_eff), in_bytes, 4,
                         weight_buffers) > budget:
        if tn_eff > 128:
            tn_eff = max(128, (tn_eff // 2 // 128) * 128)
        elif tk_eff > 512:
            tk_eff = max(128, ((tk_eff // 2) // 128) * 128)
        elif tm_d > 64:
            tm_d //= 2
        else:
            break

    num_k = _num_k(tk_eff)
    dim_in_p = dim_in if num_k == 1 else _round_up(dim_in, tk_eff)
    dim_out_p = _round_up(dim_out, tn_eff)
    num_n = dim_out_p // tn_eff

    wx, wg = w[:, :dim_out], w[:, dim_out:]
    bx, bg = b[:dim_out], b[dim_out:]
    pad_n = dim_out_p - dim_out
    pad_k = dim_in_p - dim_in
    if pad_n or pad_k:
        wx = jnp.pad(wx, ((0, pad_k), (0, pad_n)))
        wg = jnp.pad(wg, ((0, pad_k), (0, pad_n)))
        bx = jnp.pad(bx, (0, pad_n))
        bg = jnp.pad(bg, (0, pad_n))
    # each N tile j becomes [Wx[:, j-th tile] | Wg[:, j-th tile]] so the kernel
    # does one (tk, 2*tn) dot and splits the result at lane tn.
    w_r = jnp.stack(
        [wx.reshape(dim_in_p, num_n, tn_eff),
         wg.reshape(dim_in_p, num_n, tn_eff)],
        axis=2,
    ).reshape(dim_in_p, 2 * dim_out_p)
    b_r = jnp.stack(
        [bx.reshape(num_n, tn_eff), bg.reshape(num_n, tn_eff)], axis=1
    ).reshape(1, 2 * dim_out_p).astype(jnp.float32)

    return GegluParams(w_r, b_r, dim_in, dim_out, dim_in_p, dim_out_p,
                       tn_eff, tk_eff, tm_d, num_k, weight_buffers,
                       int(vmem_limit), approximate)


# ------------------------------ forward ------------------------------------


def geglu_apply(x, params: GegluParams):
    """x: [..., dim_in] -> [..., dim_out]."""
    p = params
    orig_shape = x.shape
    dim_in = orig_shape[-1]
    assert dim_in == p.dim_in, (dim_in, p.dim_in)
    M = 1
    for d in orig_shape[:-1]:
        M *= d
    out_dtype = x.dtype

    x2d = x.reshape(M, dim_in)
    if x2d.dtype != p.w_r.dtype:
        x2d = x2d.astype(p.w_r.dtype)
    # Only the K dim ever needs explicit zero-padding (and only when K is
    # tiled); ragged M / N edges are handled by Pallas partial blocks.
    if p.dim_in_p != dim_in:
        x2d = jnp.pad(x2d, ((0, 0), (0, p.dim_in_p - dim_in)))

    tm = min(p.tm_hint, _round_up(M, 32))
    tn, tk = p.tn, p.tk
    num_m = _cdiv(M, tm)
    num_n = p.dim_out_p // tn

    w_spec_kwargs = {}
    if p.weight_buffers != 2:
        # deepen weight-tile prefetch to hide N-transition DMA stalls
        w_spec_kwargs["pipeline_mode"] = pl.Buffered(p.weight_buffers)

    if p.num_k == 1:
        kernel = partial(_geglu_kernel_single_k, tn=tn,
                         approximate=p.approximate)
        grid = (num_n, num_m)
        in_specs = [
            pl.BlockSpec((tm, tk), lambda n, m: (m, 0)),
            pl.BlockSpec((tk, 2 * tn), lambda n, m: (0, n), **w_spec_kwargs),
            pl.BlockSpec((1, 2 * tn), lambda n, m: (0, n)),
        ]
        out_specs = pl.BlockSpec((tm, tn), lambda n, m: (m, n))
        scratch_shapes = []
        semantics = ("parallel", "parallel")
    else:
        # TODO(synk): if num_k > 1 ever lands on the hot path, move the K loop
        # inside the body (pltpu.emit_pipeline) so weight K-slabs are not
        # re-fetched for every M step.
        kernel = partial(_geglu_kernel_k_tiled, tn=tn,
                         approximate=p.approximate)
        num_k = p.dim_in_p // tk
        grid = (num_n, num_m, num_k)
        in_specs = [
            pl.BlockSpec((tm, tk), lambda n, m, k: (m, k)),
            pl.BlockSpec((tk, 2 * tn), lambda n, m, k: (k, n),
                         **w_spec_kwargs),
            pl.BlockSpec((1, 2 * tn), lambda n, m, k: (0, n)),
        ]
        out_specs = pl.BlockSpec((tm, tn), lambda n, m, k: (m, n))
        scratch_shapes = [pltpu.VMEM((tm, 2 * tn), jnp.float32)]
        semantics = ("parallel", "parallel", "arbitrary")

    out2d = pl.pallas_call(
        kernel,
        out_shape=jax.ShapeDtypeStruct((M, p.dim_out), out_dtype),
        grid_spec=pltpu.PrefetchScalarGridSpec(
            num_scalar_prefetch=0,
            grid=grid,
            in_specs=in_specs,
            out_specs=out_specs,
            scratch_shapes=scratch_shapes,
        ),
        compiler_params=pltpu.CompilerParams(
            dimension_semantics=semantics,
            vmem_limit_bytes=p.vmem_limit_bytes,
        ),
    )(x2d, p.w_r, p.b_r)

    return out2d.reshape(*orig_shape[:-1], p.dim_out)


def geglu(x, w, b, **kwargs):
    """One-shot convenience wrapper. Re-packs the weight on every call; real
    use should call prepare_geglu_params() once and reuse the result."""
    return geglu_apply(x, prepare_geglu_params(w, b, **kwargs))


# ------------------------------ reference ----------------------------------


def geglu_ref(x, w, b):
    dim_out = w.shape[1] // 2
    y = jnp.einsum("...d,df->...f", x, w) + b
    h, g = y[..., :dim_out], y[..., dim_out:]
    return h * jax.nn.gelu(g, approximate=False)


def _run_case(key, B, S, dim_in, dim_out, atol=2e-5, rtol=1e-5, **kwargs):
    k_x, k_w, k_b = jax.random.split(key, 3)
    x = jax.random.normal(k_x, (B, S, dim_in), dtype=jnp.float32)
    # nn.Linear(dim_in, 2*dim_out): weight [2*dim_out, dim_in], bias [2*dim_out]
    bound = 1.0 / float(dim_in) ** 0.5
    w_pt = jax.random.uniform(k_w, (2 * dim_out, dim_in), jnp.float32,
                              -bound, bound)
    b_pt = jax.random.uniform(k_b, (2 * dim_out,), jnp.float32, -bound, bound)
    w = w_pt.T  # [dim_in, 2*dim_out]

    out = jax.block_until_ready(geglu(x, w, b_pt, **kwargs))
    ref = geglu_ref(x, w, b_pt)
    assert out.shape == (B, S, dim_out), (out.shape, (B, S, dim_out))
    err = float(jnp.max(jnp.abs(out - ref)))
    assert jnp.allclose(out, ref, atol=atol, rtol=rtol), \
        f"mismatch vs reference (max abs err {err})"


if __name__ == "__main__":
    key = jax.random.PRNGKey(0)
    k1, k2, k3, k4 = jax.random.split(key, 4)

    # small canonical case (toy size of the module), exact f32 parity
    _run_case(k1, B=2, S=8, dim_in=32, dim_out=32)
    # ragged case: partial M block, multiple N tiles, partial last N tile
    _run_case(k2, B=2, S=50, dim_in=48, dim_out=160, tn=128)
    # K-reduction grid axis + f32 accumulator path (incl. K zero-padding)
    _run_case(k3, B=2, S=16, dim_in=200, dim_out=160, tn=128, tk_max=128)
    # bf16 MXU operands with f32 accumulation (production fast path)
    _run_case(k4, B=2, S=16, dim_in=64, dim_out=128,
              compute_dtype=jnp.bfloat16, atol=5e-2, rtol=5e-2)

    print("KERNEL_OK")
</pallas_src>

<mosaic_0001>
module attributes {stable_mosaic.version = 11 : i64} {
  func.func @_geglu_kernel_single_k(%arg0: i32, %arg1: i32, %arg2: memref<32x32xf32, #tpu.memory_space<vmem>>, %arg3: memref<32x256xf32, #tpu.memory_space<vmem>>, %arg4: memref<1x256xf32, #tpu.memory_space<vmem>>, %arg5: memref<32x128xf32, #tpu.memory_space<vmem>>) attributes {dimension_semantics = [#tpu.dimension_semantics<parallel>, #tpu.dimension_semantics<parallel>], iteration_bounds = array<i64: 1, 1>, scalar_prefetch = 0 : i64, scratch_operands = 0 : i64, tpu.core_type = #tpu.core_type<tc>, window_params = [{transform_indices = @transform_0, window_bounds = array<i64: 32, 32>}, {transform_indices = @transform_1, window_bounds = array<i64: 32, 256>}, {transform_indices = @transform_2, window_bounds = array<i64: 1, 256>}, {transform_indices = @transform_3, window_bounds = array<i64: 32, 128>}]} {
    %c0 = arith.constant 0 : index
    %c0_0 = arith.constant 0 : index
    %0 = vector.load %arg2[%c0, %c0_0] : memref<32x32xf32, #tpu.memory_space<vmem>>, vector<32x32xf32>
    %c0_1 = arith.constant 0 : index
    %c0_2 = arith.constant 0 : index
    %1 = vector.load %arg3[%c0_1, %c0_2] : memref<32x256xf32, #tpu.memory_space<vmem>>, vector<32x256xf32>
    %cst = arith.constant dense<0.000000e+00> : vector<32x256xf32>
    %2 = tpu.matmul %0, %1, %cst {dimension_numbers = #tpu.dot_dimension_numbers<[1], [0], [0], [1], [0, 0, 1, 1], [], []>} : vector<32x32xf32>, vector<32x256xf32>, vector<32x256xf32> -> vector<32x256xf32>
    %c0_3 = arith.constant 0 : index
    %c0_4 = arith.constant 0 : index
    %3 = vector.load %arg4[%c0_3, %c0_4] : memref<1x256xf32, #tpu.memory_space<vmem>>, vector<1x256xf32>
    %4 = vector.broadcast %3 : vector<1x256xf32> to vector<32x256xf32>
    %5 = arith.addf %2, %4 : vector<32x256xf32>
    %6 = vector.extract_strided_slice %5 {offsets = [0, 0], sizes = [32, 128], strides = [1, 1]} : vector<32x256xf32> to vector<32x128xf32>
    %7 = vector.extract_strided_slice %5 {offsets = [0, 128], sizes = [32, 128], strides = [1, 1]} : vector<32x256xf32> to vector<32x128xf32>
    %cst_5 = arith.constant 5.000000e-01 : f32
    %8 = vector.broadcast %cst_5 : f32 to vector<32x128xf32>
    %9 = arith.mulf %8, %7 : vector<32x128xf32>
    %cst_6 = arith.constant 0.707106769 : f32
    %10 = vector.broadcast %cst_6 : f32 to vector<32x128xf32>
    %11 = arith.mulf %7, %10 : vector<32x128xf32>
    %12 = math.erf %11 : vector<32x128xf32>
    %cst_7 = arith.constant 1.000000e+00 : f32
    %13 = vector.broadcast %cst_7 : f32 to vector<32x128xf32>
    %14 = arith.addf %13, %12 : vector<32x128xf32>
    %15 = arith.mulf %9, %14 : vector<32x128xf32>
    %16 = arith.mulf %6, %15 : vector<32x128xf32>
    %c0_8 = arith.constant 0 : index
    %c0_9 = arith.constant 0 : index
    %17 = vector.load %arg5[%c0_8, %c0_9] : memref<32x128xf32, #tpu.memory_space<vmem>>, vector<32x128xf32>
    tpu.vector_store %arg5[%c0_8, %c0_9], %16 {strides = array<i32>} : memref<32x128xf32, #tpu.memory_space<vmem>>, vector<32x128xf32>,
    return
  }
  func.func @transform_0(%arg0: i32, %arg1: i32) -> (i32, i32) {
    %c0_i32 = arith.constant 0 : i32
    %c0_i32_0 = arith.constant 0 : i32
    return %arg1, %c0_i32 : i32, i32
  }
  func.func @transform_1(%arg0: i32, %arg1: i32) -> (i32, i32) {
    %c0_i32 = arith.constant 0 : i32
    %c0_i32_0 = arith.constant 0 : i32
    return %c0_i32, %arg0 : i32, i32
  }
  func.func @transform_2(%arg0: i32, %arg1: i32) -> (i32, i32) {
    %c0_i32 = arith.constant 0 : i32
    %c0_i32_0 = arith.constant 0 : i32
    return %c0_i32, %arg0 : i32, i32
  }
  func.func @transform_3(%arg0: i32, %arg1: i32) -> (i32, i32) {
    %c0_i32 = arith.constant 0 : i32
    return %arg1, %arg0 : i32, i32
  }
}

</mosaic_0001>

<llo_original>
// kernel: tpu_custom_call.1
$region0: #{tpu_custom_call.1}
  #allocation0 [shape = 'u32[]', space=smem, size = 0x4, offset = 0x4, fixed_abs, tag = 'smem constant byte address 0x4 - core index']
  #allocation1 [shape = 'u32[144,128]{1,0:T(1,128)}', space=vmem, size = 0x12000, scoped, tag = 'internal scratch']
  %s0 = inlined_call_operand.hbm [shape: f32[16,32], index: 0, kind: input, shape index: {}]
  %s1 = inlined_call_operand.hbm [shape: f32[32,256], index: 1, kind: input, shape index: {}]
  %s2 = inlined_call_operand.vmem [shape: f32[1,256], index: 2, kind: input, shape index: {}]
  %s3 = inlined_call_operand.hbm [shape: f32[16,32], index: 3, kind: output, shape index: {}]
  %s4 = sld [smem:[#allocation0]]
  $region30: #{tpu_custom_call.1} parent=0
    _
  %s6 = ssub.s32 1, %s4
  %s7 = scalar_select 0, %s6, %s4
  $region1: #{tpu_custom_call.1} parent=0
    #allocation2 [shape = 'u8[16384]{0}', space=vmem, size = 0x4000, scoped, tag = 'input window, operand 0, single buffered']
    #allocation3 [shape = 's32[1]{0}', space=sflag, size = 0x4, scoped, tag = 'scoped memory for tpu_custom_call.1']
    #allocation4 [shape = 's32[1]{0}', space=sflag, size = 0x4, scoped, tag = 'scoped memory for tpu_custom_call.1']
    #allocation5 [shape = 'u8[32768]{0}', space=vmem, size = 0x8000, scoped, tag = 'input window, operand 1, single buffered']
    #allocation6 [shape = 's32[1]{0}', space=sflag, size = 0x4, scoped, tag = 'scoped memory for tpu_custom_call.1']
    #allocation7 [shape = 'u8[16384]{0}', space=vmem, size = 0x4000, scoped, tag = 'output window, operand 0, single buffered']
    %8 = vsyncpa [#allocation3], 0
    %9 = vsyncpa [#allocation6], 0
    %10 = vsyncpa [#allocation4], 0
    // Predicated region
    $region2: #{tpu_custom_call.1} parent=1 // pred_check
      _
    $region3: #{tpu_custom_call.1} parent=1 // pred_check_branch
      %12 = sbr.rel (0) target = $region5
    $region4: #{tpu_custom_call.1} parent=1 // pred_region
      %s14 = ssub.s32 512, 256
      %15 = vsyncadd [#allocation3], %s14
      %s16 = sshll.u32 [#allocation2], 4
      %s17 = int_to_ptr.vmem [resolvable:$true] %s16
      %22 = dma.hbm_to_vmem [thread:$0]  %s0, 256, %s17, [#allocation3], 128, 128, 8
    $region5: #{tpu_custom_call.1} parent=1 // pred_fallthru
      _
    // Predicated region
    $region6: #{tpu_custom_call.1} parent=1 // pred_check
      _
    $region7: #{tpu_custom_call.1} parent=1 // pred_check_branch
      %24 = sbr.rel (0) target = $region9
    $region8: #{tpu_custom_call.1} parent=1 // pred_region
      %s26 = ssub.s32 1024, 1024
      %27 = vsyncadd [#allocation6], %s26
      %s28 = sshll.u32 [#allocation5], 4
      %s29 = int_to_ptr.vmem [resolvable:$true] %s28
      %34 = dma.hbm_to_vmem [thread:$0]  %s1, 1024, %s29, [#allocation6], 256, 256, 16
    $region9: #{tpu_custom_call.1} parent=1 // pred_fallthru
      _
    // Predicated region
    $region10: #{tpu_custom_call.1} parent=1 // pred_check
      _
    $region11: #{tpu_custom_call.1} parent=1 // pred_check_branch
      %36 = sbr.rel (0) target = $region13
    $region12: #{tpu_custom_call.1} parent=1 // pred_region
      _
    $region13: #{tpu_custom_call.1} parent=1 // pred_fallthru
      _
    // Predicated region
    $region14: #{tpu_custom_call.1} parent=1 // pred_check
      _
    $region15: #{tpu_custom_call.1} parent=1 // pred_check_branch
      %38 = sbr.rel (0) target = $region17
    $region16: #{tpu_custom_call.1} parent=1 // pred_region
      %39 = dma.done [#allocation3], 512
    $region17: #{tpu_custom_call.1} parent=1 // pred_fallthru
      _
    // Predicated region
    $region18: #{tpu_custom_call.1} parent=1 // pred_check
      _
    $region19: #{tpu_custom_call.1} parent=1 // pred_check_branch
      %41 = sbr.rel (0) target = $region21
    $region20: #{tpu_custom_call.1} parent=1 // pred_region
      %42 = dma.done [#allocation6], 1024
    $region21: #{tpu_custom_call.1} parent=1 // pred_fallthru
      _
    %v43 = vld [vmem:[#allocation2] sm:$0xff]
    %v44 = vld [vmem:[#allocation2 + $0x8] sm:$0xff]
    %v45 = vld [vmem:[#allocation2 + $0x10] sm:$0xff]
    %v46 = vld [vmem:[#allocation2 + $0x18] sm:$0xff]
    %v47 = vld [vmem:[#allocation5] sm:$0xff]
    %v48 = vld [vmem:[#allocation5 + $0x8] sm:$0xff]
    %v49 = vld [vmem:[#allocation5 + $0x10] sm:$0xff]
    %v50 = vld [vmem:[#allocation5 + $0x18] sm:$0xff]
    %v51 = vld [vmem:[#allocation5 + $0x20] sm:$0xff]
    %v52 = vld [vmem:[#allocation5 + $0x28] sm:$0xff]
    %v53 = vld [vmem:[#allocation5 + $0x30] sm:$0xff]
    %v54 = vld [vmem:[#allocation5 + $0x38] sm:$0xff]
    %v55 = vld [vmem:[%s2] sm:$0x3]
    %v57 = vlaneseq
    %v58 = vshrl.u32 %v57, 7
    %v59 = vsub.s32 0, %v58
    %v60 = vrot.slane %v55, %v59
    %v61 = vlaneseq
    %v62 = vshrl.u32 %v61, 7
    %v63 = vsub.s32 1, %v62
    %v64 = vrot.slane %v55, %v63
    %vm67 = vcmask 261120
    %v69 = vsel %vm67, %v43, 0
    %v72 = vsel %vm67, %v44, 0
    %v75 = vsel %vm67, %v45, 0
    %v78 = vsel %vm67, %v46, 0
    %80 = vmatprep.subr.mxu0 %v48
    %81 = vmatpush1.msra.mxu0 %v47
    %82 = vmatprep.subr.mxu0 %v50
    %83 = vmatpush1.msra.mxu0 %v49
    %84 = vmatprep.subr.mxu0 %v52
    %85 = vmatpush1.msra.mxu0 %v51
    %86 = vmatprep.subr.mxu0 %v54
    %87 = vmatpush1.msra.mxu0 %v53
    %88 = vmatprep.subr.mxu0 0.0
    %89 = vmatpush1.msra.mxu0 0.0
    %90 = vmatprep.subr.mxu0 0.0
    %91 = vmatpush1.msra.mxu0 0.0
    %92 = vmatprep.subr.mxu0 0.0
    %93 = vmatpush1.msra.mxu0 0.0
    %94 = vmatprep.subr.mxu0 0.0
    %95 = vmatpush1.msra.mxu0 0.0
    %96 = vmatprep.subr.mxu0 0.0
    %97 = vmatpush1.msra.mxu0 0.0
    %98 = vmatprep.subr.mxu0 0.0
    %99 = vmatpush1.msra.mxu0 0.0
    %100 = vmatprep.subr.mxu0 0.0
    %101 = vmatpush1.msra.mxu0 0.0
    %102 = vmatprep.subr.mxu0 0.0
    %103 = vmatpush1.msra.mxu0 0.0
    %104 = vmatprep.subr.mxu0 0.0
    %105 = vmatpush1.msra.mxu0 0.0
    %106 = vmatprep.subr.mxu0 0.0
    %107 = vmatpush1.msra.mxu0 0.0
    %108 = vmatprep.subr.mxu0 0.0
    %109 = vmatpush1.msra.mxu0 0.0
    %110 = vmatprep.subr.mxu0 0.0
    %111 = vmatpush1.msra.mxu0 0.0
    %112 = vmatprep.subr.mxu0 0.0
    %113 = vmatpush1.msra.mxu0 0.0
    %114 = vmatprep.subr.mxu0 0.0
    %115 = vmatpush1.msra.mxu0 0.0
    %116 = vmatprep.subr.mxu0 0.0
    %117 = vmatpush1.msra.mxu0 0.0
    %118 = vmatprep.subr.mxu0 0.0
    %119 = vmatpush1.msra.mxu0 0.0
    %120 = vmatprep.subr.mxu0 0.0
    %121 = vmatpush1.msra.mxu0 0.0
    %122 = vmatprep.subr.mxu0 0.0
    %123 = vmatpush1.msra.mxu0 0.0
    %124 = vmatprep.subr.mxu0 0.0
    %125 = vmatpush1.msra.mxu0 0.0
    %126 = vmatprep.subr.mxu0 0.0
    %127 = vmatpush1.msra.mxu0 0.0
    %128 = vmatprep.subr.mxu0 0.0
    %129 = vmatpush1.msra.mxu0 0.0
    %130 = vmatprep.subr.mxu0 0.0
    %131 = vmatpush1.msra.mxu0 0.0
    %132 = vmatprep.subr.mxu0 0.0
    %133 = vmatpush1.msra.mxu0 0.0
    %134 = vmatprep.subr.mxu0 0.0
    %135 = vmatpush1.msra.mxu0 0.0
    %136 = vmatprep.subr.mxu0 0.0
    %137 = vmatpush1.msra.mxu0 0.0
    %138 = vmatprep.subr.mxu0 0.0
    %139 = vmatpush1.msra.mxu0 0.0
    %140 = vmatprep.subr.mxu0 0.0
    %141 = vmatpush1.msra.mxu0 0.0
    %142 = vmatprep.subr.mxu0 0.0
    %143 = vmatpush1.msra.mxu0 0.0
    %144 = vmatprep.mubr.f32.mxu0 0.0
    %145 = vmatmul.mubr.f32.gmra.mrb[0].mxu0 %v69
    %v146 = vpop.f32.mrb[0].mxu0
    %v147 = vadd.f32 %v60, %v146
    %v148 = vpop.f32.mrb[0].mxu0
    %v149 = vadd.f32 %v64, %v148
    %150 = vmatprep.mubr.f32.mxu0 0.0
    %151 = vmatmul.mubr.f32.gmra.mrb[0].mxu0 %v72
    %v152 = vpop.f32.mrb[0].mxu0
    %v153 = vadd.f32 %v60, %v152
    %v154 = vpop.f32.mrb[0].mxu0
    %v155 = vadd.f32 %v64, %v154
    %156 = vmatprep.mubr.f32.mxu0 0.0
    %157 = vmatmul.mubr.f32.gmra.mrb[0].mxu0 %v75
    %v158 = vpop.f32.mrb[0].mxu0
    %v159 = vadd.f32 %v60, %v158
    %v160 = vpop.f32.mrb[0].mxu0
    %v161 = vadd.f32 %v64, %v160
    %162 = vmatprep.mubr.f32.mxu0 0.0
    %163 = vmatmul.mubr.f32.gmra.mrb[0].mxu0 %v78
    %v164 = vpop.f32.mrb[0].mxu0
    %v165 = vadd.f32 %v60, %v164
    %v166 = vpop.f32.mrb[0].mxu0
    %v167 = vadd.f32 %v64, %v166
    %168 = vdwg.mxu0
    %v169 = vmul.f32 %v149, 0.5
    %v170 = vmul.f32 %v155, 0.5
    %v171 = vmul.f32 %v161, 0.5
    %v172 = vmul.f32 %v167, 0.5
    %v173 = vmul.f32 %v149, 0.70710677
    %v174 = vmul.f32 %v155, 0.70710677
    %v175 = vmul.f32 %v161, 0.70710677
    %v176 = vmul.f32 %v167, 0.70710677
    %v177 = verf.f32.pop %v173
    %v178 = verf.f32.pop %v174
    %v179 = verf.f32.pop %v175
    %v180 = verf.f32.pop %v176
    %v181 = vadd.f32 %v177, 1.0
    %v182 = vadd.f32 %v178, 1.0
    %v183 = vadd.f32 %v179, 1.0
    %v184 = vadd.f32 %v180, 1.0
    %v185 = vmul.f32 %v169, %v181
    %v186 = vmul.f32 %v170, %v182
    %v187 = vmul.f32 %v171, %v183
    %v188 = vmul.f32 %v172, %v184
    %v189 = vmul.f32 %v147, %v185
    %v190 = vmul.f32 %v153, %v186
    %v191 = vmul.f32 %v159, %v187
    %v192 = vmul.f32 %v165, %v188
    %193 = vst [vmem:[#allocation7] sm:$0xff] %v189
    %194 = vst [vmem:[#allocation7 + $0x8] sm:$0xff] %v190
    %195 = vst [vmem:[#allocation7 + $0x10] sm:$0xff] %v191
    %196 = vst [vmem:[#allocation7 + $0x18] sm:$0xff] %v192
    // Predicated region
    $region22: #{tpu_custom_call.1} parent=1 // pred_check
      _
    $region23: #{tpu_custom_call.1} parent=1 // pred_check_branch
      %198 = sbr.rel (0) target = $region25
    $region24: #{tpu_custom_call.1} parent=1 // pred_region
      %s200 = ssub.s32 512, 256
      %201 = vsyncadd [#allocation4], %s200
      %s202 = sshll.u32 [#allocation7], 4
      %s203 = int_to_ptr.vmem [resolvable:$true] %s202
      %208 = dma.vmem_to_hbm [thread:$0]  %s203, 256, %s3, [#allocation4], 128, 128, 8
    $region25: #{tpu_custom_call.1} parent=1 // pred_fallthru
      _
    // Predicated region
    $region26: #{tpu_custom_call.1} parent=1 // pred_check
      _
    $region27: #{tpu_custom_call.1} parent=1 // pred_check_branch
      %210 = sbr.rel (0) target = $region29
    $region28: #{tpu_custom_call.1} parent=1 // pred_region
      %211 = dma.done [#allocation4], 512
    $region29: #{tpu_custom_call.1} parent=1 // pred_fallthru
      _
    %212 = vsyncpa [#allocation3], 1
    %213 = vsyncpa [#allocation6], 1
    %214 = vsyncpa [#allocation4], 1

</llo_original>
